<compile_context>
chip_gen: v7x
topology: tpu7x:2x2x1
jax: 0.10.0
libtpu: 0.0.40
codegen_flags: <defaults>
</compile_context>

<pallas_src>
import numpy as np
import jax
import jax.numpy as jnp
from jax.experimental import pallas as pl
from jax.experimental.pallas import tpu as pltpu

LANE = 128
SUBLANE = 8


def _round_up(x, m):
    return ((x + m - 1) // m) * m


# ---------------------------------------------------------------------------
# Fused kernel: embed support & query, build class prototypes, -cdist scores.
# All inputs fit in VMEM in one step; only the (nq, n_way_pad) scores go back
# to HBM (lane-dense, n_way_pad = 128).
# ---------------------------------------------------------------------------
def proto_net_kernel(xs_ref, xq_ref, w_ref, b_ref, onehot_ref, inv_cnt_ref,
                     scores_ref):
    w = w_ref[...]                       # [K, D_pad]
    b = b_ref[...]                       # [1, D_pad]

    # Embedding backbone: Flatten + Linear (f32 MXU accumulation).
    zs = jnp.dot(xs_ref[...], w, preferred_element_type=jnp.float32) + b
    zq = jnp.dot(xq_ref[...], w, preferred_element_type=jnp.float32) + b

    # Class prototypes = per-label mean of support embeddings.
    # onehot: [n_way_pad, Ns], inv_cnt: [n_way_pad, 1] (0 for empty classes).
    proto = jnp.dot(onehot_ref[...], zs,
                    preferred_element_type=jnp.float32) * inv_cnt_ref[...]

    # Negative Euclidean distance (torch.cdist semantics), expanded form with
    # f32 accumulation.  One small transpose keeps both matmuls canonical.
    proto_t = proto.T                                            # [D_pad, n_way_pad]
    q_sq = jnp.sum(zq * zq, axis=-1, keepdims=True)              # [Nq, 1]
    p_sq = jnp.sum(proto_t * proto_t, axis=0, keepdims=True)     # [1, n_way_pad]
    cross = jnp.dot(zq, proto_t, preferred_element_type=jnp.float32)

    d2 = jnp.maximum(q_sq + p_sq - 2.0 * cross, 0.0)
    scores_ref[...] = -jnp.sqrt(d2)


# ---------------------------------------------------------------------------
# Full PrototypicalNetwork forward (wrapper: padding + single pallas_call)
# ---------------------------------------------------------------------------
def prototypical_forward(support_images, support_labels, query_images,
                         w_emb, b_emb, n_way):
    ns = support_images.shape[0]
    nq = query_images.shape[0]
    k_in, d_emb = w_emb.shape

    xs = support_images.reshape(ns, -1).astype(jnp.float32)
    xq = query_images.reshape(nq, -1).astype(jnp.float32)

    # Zero-pad the embedding dim to a full lane width.  Padded embedding
    # columns are exactly zero for every sample (zero weights + zero bias), so
    # all pairwise distances are unchanged, but every store is lane-dense.
    d_pad = _round_up(d_emb, LANE)
    w_pad = jnp.pad(w_emb.astype(jnp.float32), ((0, 0), (0, d_pad - d_emb)))
    b_pad = jnp.pad(b_emb.astype(jnp.float32).reshape(1, d_emb),
                    ((0, 0), (0, d_pad - d_emb)))

    # Pad n_way to a full lane width: extra one-hot rows are all-zero, their
    # prototypes are zero, and the wrapper slices them away.
    n_way_pad = _round_up(n_way, LANE)
    onehot = (support_labels[None, :] ==
              jnp.arange(n_way_pad, dtype=support_labels.dtype)[:, None]
              ).astype(jnp.float32)                               # [n_way_pad, Ns]
    counts = jnp.sum(onehot, axis=1, keepdims=True)               # [n_way_pad, 1]
    inv_cnt = jnp.where(counts > 0, 1.0 / jnp.maximum(counts, 1.0), 0.0)

    scores_pad = pl.pallas_call(
        proto_net_kernel,
        out_shape=jax.ShapeDtypeStruct((nq, n_way_pad), jnp.float32),
        grid_spec=pltpu.PrefetchScalarGridSpec(
            num_scalar_prefetch=0,
            grid=(1,),
            in_specs=[
                pl.BlockSpec((ns, k_in), lambda i: (0, 0)),
                pl.BlockSpec((nq, k_in), lambda i: (0, 0)),
                pl.BlockSpec((k_in, d_pad), lambda i: (0, 0)),
                pl.BlockSpec((1, d_pad), lambda i: (0, 0)),
                pl.BlockSpec((n_way_pad, ns), lambda i: (0, 0)),
                pl.BlockSpec((n_way_pad, 1), lambda i: (0, 0)),
            ],
            out_specs=pl.BlockSpec((nq, n_way_pad), lambda i: (0, 0)),
        ),
        compiler_params=pltpu.CompilerParams(
            dimension_semantics=("arbitrary",)),
    )(xs, xq, w_pad, b_pad, onehot, inv_cnt)

    return scores_pad[:, :n_way]


# ---------------------------------------------------------------------------
# Reference (plain JAX) for correctness check
# ---------------------------------------------------------------------------
def reference_forward(support_images, support_labels, query_images,
                      w_emb, b_emb, n_way):
    zs = support_images.reshape(support_images.shape[0], -1) @ w_emb + b_emb[0]
    zq = query_images.reshape(query_images.shape[0], -1) @ w_emb + b_emb[0]
    protos = jnp.stack(
        [zs[support_labels == c].mean(axis=0) for c in range(n_way)], axis=0)
    dists = jnp.sqrt(jnp.maximum(
        jnp.sum((zq[:, None, :] - protos[None, :, :]) ** 2, axis=-1), 0.0))
    return -dists


if __name__ == "__main__":
    key = jax.random.PRNGKey(0)
    k_w, k_b, k_s, k_q = jax.random.split(key, 4)

    # Small episode: n_way=4, n_shot=2 support, 8 query images, images NCHW.
    N_WAY, N_SHOT, N_QUERY = 4, 2, 8
    C, H, W = 4, 16, 16
    D_IN, D_EMB = C * H * W, 32

    w_emb = jax.random.normal(k_w, (D_IN, D_EMB), jnp.float32) * 0.05
    b_emb = jax.random.normal(k_b, (1, D_EMB), jnp.float32) * 0.05

    support_images = jax.random.normal(
        k_s, (N_WAY * N_SHOT, C, H, W), jnp.float32)
    query_images = jax.random.normal(k_q, (N_QUERY, C, H, W), jnp.float32)
    support_labels = jnp.array([0, 0, 1, 1, 2, 2, 3, 3], dtype=jnp.int32)

    # n_way = len(unique(support_labels)); computed host-side because Pallas
    # needs static shapes (torch.unique has no static-shape equivalent).
    n_way = int(np.unique(np.asarray(support_labels)).size)

    scores = prototypical_forward(support_images, support_labels,
                                  query_images, w_emb, b_emb, n_way)
    scores = jax.block_until_ready(scores)

    ref = reference_forward(support_images, support_labels, query_images,
                            w_emb, b_emb, n_way)
    np.testing.assert_allclose(np.asarray(scores), np.asarray(ref),
                               rtol=1e-4, atol=1e-4)
    print("KERNEL_OK")
</pallas_src>

<mosaic_0001>
module attributes {stable_mosaic.version = 11 : i64} {
  func.func @proto_net_kernel(%arg0: i32, %arg1: memref<8x1024xf32, #tpu.memory_space<vmem>>, %arg2: memref<8x1024xf32, #tpu.memory_space<vmem>>, %arg3: memref<1024x128xf32, #tpu.memory_space<vmem>>, %arg4: memref<1x128xf32, #tpu.memory_space<vmem>>, %arg5: memref<128x8xf32, #tpu.memory_space<vmem>>, %arg6: memref<128x1xf32, #tpu.memory_space<vmem>>, %arg7: memref<8x128xf32, #tpu.memory_space<vmem>>) attributes {dimension_semantics = [#tpu.dimension_semantics<arbitrary>], iteration_bounds = array<i64: 1>, scalar_prefetch = 0 : i64, scratch_operands = 0 : i64, tpu.core_type = #tpu.core_type<tc>, window_params = [{pipeline_mode = #tpu.pipeline_mode<synchronous>, transform_indices = @transform_0, window_bounds = array<i64: 8, 1024>}, {pipeline_mode = #tpu.pipeline_mode<synchronous>, transform_indices = @transform_1, window_bounds = array<i64: 8, 1024>}, {pipeline_mode = #tpu.pipeline_mode<synchronous>, transform_indices = @transform_2, window_bounds = array<i64: 1024, 128>}, {pipeline_mode = #tpu.pipeline_mode<synchronous>, transform_indices = @transform_3, window_bounds = array<i64: 1, 128>}, {pipeline_mode = #tpu.pipeline_mode<synchronous>, transform_indices = @transform_4, window_bounds = array<i64: 128, 8>}, {pipeline_mode = #tpu.pipeline_mode<synchronous>, transform_indices = @transform_5, window_bounds = array<i64: 128, 1>}, {pipeline_mode = #tpu.pipeline_mode<synchronous>, transform_indices = @transform_6, window_bounds = array<i64: 8, 128>}]} {
    %c0 = arith.constant 0 : index
    %c0_0 = arith.constant 0 : index
    %0 = vector.load %arg3[%c0, %c0_0] : memref<1024x128xf32, #tpu.memory_space<vmem>>, vector<1024x128xf32>
    %c0_1 = arith.constant 0 : index
    %c0_2 = arith.constant 0 : index
    %1 = vector.load %arg4[%c0_1, %c0_2] : memref<1x128xf32, #tpu.memory_space<vmem>>, vector<1x128xf32>
    %c0_3 = arith.constant 0 : index
    %c0_4 = arith.constant 0 : index
    %2 = vector.load %arg1[%c0_3, %c0_4] : memref<8x1024xf32, #tpu.memory_space<vmem>>, vector<8x1024xf32>
    %cst = arith.constant dense<0.000000e+00> : vector<8x128xf32>
    %3 = tpu.matmul %2, %0, %cst {dimension_numbers = #tpu.dot_dimension_numbers<[1], [0], [0], [1], [0, 0, 1, 1], [], []>} : vector<8x1024xf32>, vector<1024x128xf32>, vector<8x128xf32> -> vector<8x128xf32>
    %4 = vector.broadcast %1 : vector<1x128xf32> to vector<8x128xf32>
    %5 = arith.addf %3, %4 : vector<8x128xf32>
    %c0_5 = arith.constant 0 : index
    %c0_6 = arith.constant 0 : index
    %6 = vector.load %arg2[%c0_5, %c0_6] : memref<8x1024xf32, #tpu.memory_space<vmem>>, vector<8x1024xf32>
    %cst_7 = arith.constant dense<0.000000e+00> : vector<8x128xf32>
    %7 = tpu.matmul %6, %0, %cst_7 {dimension_numbers = #tpu.dot_dimension_numbers<[1], [0], [0], [1], [0, 0, 1, 1], [], []>} : vector<8x1024xf32>, vector<1024x128xf32>, vector<8x128xf32> -> vector<8x128xf32>
    %8 = vector.broadcast %1 : vector<1x128xf32> to vector<8x128xf32>
    %9 = arith.addf %7, %8 : vector<8x128xf32>
    %c0_8 = arith.constant 0 : index
    %c0_9 = arith.constant 0 : index
    %10 = vector.load %arg5[%c0_8, %c0_9] : memref<128x8xf32, #tpu.memory_space<vmem>>, vector<128x8xf32>
    %cst_10 = arith.constant dense<0.000000e+00> : vector<128x128xf32>
    %11 = tpu.matmul %10, %5, %cst_10 {dimension_numbers = #tpu.dot_dimension_numbers<[1], [0], [0], [1], [0, 0, 1, 1], [], []>} : vector<128x8xf32>, vector<8x128xf32>, vector<128x128xf32> -> vector<128x128xf32>
    %c0_11 = arith.constant 0 : index
    %c0_12 = arith.constant 0 : index
    %12 = vector.load %arg6[%c0_11, %c0_12] : memref<128x1xf32, #tpu.memory_space<vmem>>, vector<128x1xf32>
    %13 = vector.broadcast %12 : vector<128x1xf32> to vector<128x128xf32>
    %14 = arith.mulf %11, %13 : vector<128x128xf32>
    %15 = tpu.transpose %14, [1, 0] : vector<128x128xf32> -> vector<128x128xf32>
    %16 = arith.mulf %9, %9 : vector<8x128xf32>
    %cst_13 = arith.constant dense<0.000000e+00> : vector<8xf32>
    %17 = vector.multi_reduction <add>, %16, %cst_13 [1] : vector<8x128xf32> to vector<8xf32>
    %18 = vector.shape_cast %17 : vector<8xf32> to vector<8x1xf32>
    %19 = arith.mulf %15, %15 : vector<128x128xf32>
    %cst_14 = arith.constant dense<0.000000e+00> : vector<128xf32>
    %20 = vector.multi_reduction <add>, %19, %cst_14 [0] : vector<128x128xf32> to vector<128xf32>
    %21 = vector.shape_cast %20 : vector<128xf32> to vector<1x128xf32>
    %cst_15 = arith.constant dense<0.000000e+00> : vector<8x128xf32>
    %22 = tpu.matmul %9, %15, %cst_15 {dimension_numbers = #tpu.dot_dimension_numbers<[1], [0], [0], [1], [0, 0, 1, 1], [], []>} : vector<8x128xf32>, vector<128x128xf32>, vector<8x128xf32> -> vector<8x128xf32>
    %23 = vector.broadcast %18 : vector<8x1xf32> to vector<8x128xf32>
    %24 = vector.broadcast %21 : vector<1x128xf32> to vector<8x128xf32>
    %25 = arith.addf %23, %24 : vector<8x128xf32>
    %cst_16 = arith.constant 2.000000e+00 : f32
    %26 = vector.broadcast %cst_16 : f32 to vector<8x128xf32>
    %27 = arith.mulf %26, %22 : vector<8x128xf32>
    %28 = arith.subf %25, %27 : vector<8x128xf32>
    %cst_17 = arith.constant 0.000000e+00 : f32
    %29 = vector.broadcast %cst_17 : f32 to vector<8x128xf32>
    %30 = arith.maximumf %28, %29 : vector<8x128xf32>
    %31 = math.sqrt %30 : vector<8x128xf32>
    %cst_18 = arith.constant 0.000000e+00 : f32
    %32 = vector.broadcast %cst_18 : f32 to vector<8x128xf32>
    %33 = arith.subf %32, %31 : vector<8x128xf32>
    %c0_19 = arith.constant 0 : index
    %c0_20 = arith.constant 0 : index
    %34 = vector.load %arg7[%c0_19, %c0_20] : memref<8x128xf32, #tpu.memory_space<vmem>>, vector<8x128xf32>
    tpu.vector_store %arg7[%c0_19, %c0_20], %33 {strides = array<i32>} : memref<8x128xf32, #tpu.memory_space<vmem>>, vector<8x128xf32>,
    return
  }
  func.func @transform_0(%arg0: i32) -> (i32, i32) {
    %c0_i32 = arith.constant 0 : i32
    %c0_i32_0 = arith.constant 0 : i32
    %c0_i32_1 = arith.constant 0 : i32
    return %c0_i32, %c0_i32_0 : i32, i32
  }
  func.func @transform_1(%arg0: i32) -> (i32, i32) {
    %c0_i32 = arith.constant 0 : i32
    %c0_i32_0 = arith.constant 0 : i32
    %c0_i32_1 = arith.constant 0 : i32
    return %c0_i32, %c0_i32_0 : i32, i32
  }
  func.func @transform_2(%arg0: i32) -> (i32, i32) {
    %c0_i32 = arith.constant 0 : i32
    %c0_i32_0 = arith.constant 0 : i32
    %c0_i32_1 = arith.constant 0 : i32
    return %c0_i32, %c0_i32_0 : i32, i32
  }
  func.func @transform_3(%arg0: i32) -> (i32, i32) {
    %c0_i32 = arith.constant 0 : i32
    %c0_i32_0 = arith.constant 0 : i32
    %c0_i32_1 = arith.constant 0 : i32
    return %c0_i32, %c0_i32_0 : i32, i32
  }
  func.func @transform_4(%arg0: i32) -> (i32, i32) {
    %c0_i32 = arith.constant 0 : i32
    %c0_i32_0 = arith.constant 0 : i32
    %c0_i32_1 = arith.constant 0 : i32
    return %c0_i32, %c0_i32_0 : i32, i32
  }
  func.func @transform_5(%arg0: i32) -> (i32, i32) {
    %c0_i32 = arith.constant 0 : i32
    %c0_i32_0 = arith.constant 0 : i32
    %c0_i32_1 = arith.constant 0 : i32
    return %c0_i32, %c0_i32_0 : i32, i32
  }
  func.func @transform_6(%arg0: i32) -> (i32, i32) {
    %c0_i32 = arith.constant 0 : i32
    %c0_i32_0 = arith.constant 0 : i32
    %c0_i32_1 = arith.constant 0 : i32
    return %c0_i32, %c0_i32_0 : i32, i32
  }
}

</mosaic_0001>

<llo_original>
// kernel: tpu_custom_call.1
$region0: #{tpu_custom_call.1}
  #allocation0 [shape = 'u32[]', space=smem, size = 0x4, offset = 0x4, fixed_abs, tag = 'smem constant byte address 0x4 - core index']
  #allocation1 [shape = 'u32[144,128]{1,0:T(1,128)}', space=vmem, size = 0x12000, scoped, tag = 'internal scratch']
  %s0 = inlined_call_operand.vmem [shape: f32[8,1024], index: 0, kind: input, shape index: {}]
  %s1 = inlined_call_operand.vmem [shape: f32[8,1024], index: 1, kind: input, shape index: {}]
  %s2 = inlined_call_operand.hbm [shape: f32[1024,128], index: 2, kind: input, shape index: {}]
  %s3 = inlined_call_operand.vmem [shape: f32[1,128], index: 3, kind: input, shape index: {}]
  %s4 = inlined_call_operand.vmem [shape: f32[128,8], index: 4, kind: input, shape index: {}]
  %s5 = inlined_call_operand.vmem [shape: f32[128,1], index: 5, kind: input, shape index: {}]
  %s6 = inlined_call_operand.hbm [shape: f32[8,128], index: 6, kind: output, shape index: {}]
  %s7 = sld [smem:[#allocation0]]
  $region38: #{tpu_custom_call.1} parent=0
    _
  %s9 = ssub.s32 1, %s7
  %s10 = scalar_select 0, %s9, %s7
  $region1: #{tpu_custom_call.1} parent=0
    #allocation2 [shape = 'u8[524288]{0}', space=vmem, size = 0x80000, scoped, tag = 'input window, operand 2, single buffered']
    #allocation3 [shape = 's32[1]{0}', space=sflag, size = 0x4, scoped, tag = 'scoped memory for tpu_custom_call.1']
    #allocation4 [shape = 's32[1]{0}', space=sflag, size = 0x4, scoped, tag = 'scoped memory for tpu_custom_call.1']
    #allocation5 [shape = 'u8[4096]{0}', space=vmem, size = 0x1000, scoped, tag = 'output window, operand 0, single buffered']
    %11 = vsyncpa [#allocation3], 0
    %12 = vsyncpa [#allocation4], 0
    // Predicated region
    $region2: #{tpu_custom_call.1} parent=1 // pred_check
      _
    $region3: #{tpu_custom_call.1} parent=1 // pred_check_branch
      %14 = sbr.rel (0) target = $region5
    $region4: #{tpu_custom_call.1} parent=1 // pred_region
      _
    $region5: #{tpu_custom_call.1} parent=1 // pred_fallthru
      _
    // Predicated region
    $region6: #{tpu_custom_call.1} parent=1 // pred_check
      _
    $region7: #{tpu_custom_call.1} parent=1 // pred_check_branch
      %16 = sbr.rel (0) target = $region9
    $region8: #{tpu_custom_call.1} parent=1 // pred_region
      _
    $region9: #{tpu_custom_call.1} parent=1 // pred_fallthru
      _
    // Predicated region
    $region10: #{tpu_custom_call.1} parent=1 // pred_check
      _
    $region11: #{tpu_custom_call.1} parent=1 // pred_check_branch
      %18 = sbr.rel (0) target = $region13
    $region12: #{tpu_custom_call.1} parent=1 // pred_region
      %s20 = ssub.s32 16384, 16384
      %21 = vsyncadd [#allocation3], %s20
      %s22 = sshll.u32 [#allocation2], 4
      %s23 = int_to_ptr.vmem [resolvable:$true] %s22
      %28 = dma.hbm_to_vmem [thread:$0]  %s2, 16384, %s23, [#allocation3], 128, 128, 8
    $region13: #{tpu_custom_call.1} parent=1 // pred_fallthru
      _
    // Predicated region
    $region14: #{tpu_custom_call.1} parent=1 // pred_check
      _
    $region15: #{tpu_custom_call.1} parent=1 // pred_check_branch
      %30 = sbr.rel (0) target = $region17
    $region16: #{tpu_custom_call.1} parent=1 // pred_region
      _
    $region17: #{tpu_custom_call.1} parent=1 // pred_fallthru
      _
    // Predicated region
    $region18: #{tpu_custom_call.1} parent=1 // pred_check
      _
    $region19: #{tpu_custom_call.1} parent=1 // pred_check_branch
      %32 = sbr.rel (0) target = $region21
    $region20: #{tpu_custom_call.1} parent=1 // pred_region
      _
    $region21: #{tpu_custom_call.1} parent=1 // pred_fallthru
      _
    // Predicated region
    $region22: #{tpu_custom_call.1} parent=1 // pred_check
      _
    $region23: #{tpu_custom_call.1} parent=1 // pred_check_branch
      %34 = sbr.rel (0) target = $region25
    $region24: #{tpu_custom_call.1} parent=1 // pred_region
      _
    $region25: #{tpu_custom_call.1} parent=1 // pred_fallthru
      _
    // Predicated region
    $region26: #{tpu_custom_call.1} parent=1 // pred_check
      _
    $region27: #{tpu_custom_call.1} parent=1 // pred_check_branch
      %36 = sbr.rel (0) target = $region29
    $region28: #{tpu_custom_call.1} parent=1 // pred_region
      %37 = dma.done [#allocation3], 16384
    $region29: #{tpu_custom_call.1} parent=1 // pred_fallthru
      _
    %v38 = vld [vmem:[#allocation2] sm:$0xff]
    %v39 = vld [vmem:[#allocation2 + $0x8] sm:$0xff]
    %v40 = vld [vmem:[#allocation2 + $0x10] sm:$0xff]
    %v41 = vld [vmem:[#allocation2 + $0x18] sm:$0xff]
    %v42 = vld [vmem:[#allocation2 + $0x20] sm:$0xff]
    %v43 = vld [vmem:[#allocation2 + $0x28] sm:$0xff]
    %v44 = vld [vmem:[#allocation2 + $0x30] sm:$0xff]
    %v45 = vld [vmem:[#allocation2 + $0x38] sm:$0xff]
    %v46 = vld [vmem:[#allocation2 + $0x40] sm:$0xff]
    %v47 = vld [vmem:[#allocation2 + $0x48] sm:$0xff]
    %v48 = vld [vmem:[#allocation2 + $0x50] sm:$0xff]
    %v49 = vld [vmem:[#allocation2 + $0x58] sm:$0xff]
    %v50 = vld [vmem:[#allocation2 + $0x60] sm:$0xff]
    %v51 = vld [vmem:[#allocation2 + $0x68] sm:$0xff]
    %v52 = vld [vmem:[#allocation2 + $0x70] sm:$0xff]
    %v53 = vld [vmem:[#allocation2 + $0x78] sm:$0xff]
    %v54 = vld [vmem:[#allocation2 + $0x80] sm:$0xff]
    %v55 = vld [vmem:[#allocation2 + $0x88] sm:$0xff]
    %v56 = vld [vmem:[#allocation2 + $0x90] sm:$0xff]
    %v57 = vld [vmem:[#allocation2 + $0x98] sm:$0xff]
    %v58 = vld [vmem:[#allocation2 + $0xa0] sm:$0xff]
    %v59 = vld [vmem:[#allocation2 + $0xa8] sm:$0xff]
    %v60 = vld [vmem:[#allocation2 + $0xb0] sm:$0xff]
    %v61 = vld [vmem:[#allocation2 + $0xb8] sm:$0xff]
    %v62 = vld [vmem:[#allocation2 + $0xc0] sm:$0xff]
    %v63 = vld [vmem:[#allocation2 + $0xc8] sm:$0xff]
    %v64 = vld [vmem:[#allocation2 + $0xd0] sm:$0xff]
    %v65 = vld [vmem:[#allocation2 + $0xd8] sm:$0xff]
    %v66 = vld [vmem:[#allocation2 + $0xe0] sm:$0xff]
    %v67 = vld [vmem:[#allocation2 + $0xe8] sm:$0xff]
    %v68 = vld [vmem:[#allocation2 + $0xf0] sm:$0xff]
    %v69 = vld [vmem:[#allocation2 + $0xf8] sm:$0xff]
    %v70 = vld [vmem:[#allocation2 + $0x100] sm:$0xff]
    %v71 = vld [vmem:[#allocation2 + $0x108] sm:$0xff]
    %v72 = vld [vmem:[#allocation2 + $0x110] sm:$0xff]
    %v73 = vld [vmem:[#allocation2 + $0x118] sm:$0xff]
    %v74 = vld [vmem:[#allocation2 + $0x120] sm:$0xff]
    %v75 = vld [vmem:[#allocation2 + $0x128] sm:$0xff]
    %v76 = vld [vmem:[#allocation2 + $0x130] sm:$0xff]
    %v77 = vld [vmem:[#allocation2 + $0x138] sm:$0xff]
    %v78 = vld [vmem:[#allocation2 + $0x140] sm:$0xff]
    %v79 = vld [vmem:[#allocation2 + $0x148] sm:$0xff]
    %v80 = vld [vmem:[#allocation2 + $0x150] sm:$0xff]
    %v81 = vld [vmem:[#allocation2 + $0x158] sm:$0xff]
    %v82 = vld [vmem:[#allocation2 + $0x160] sm:$0xff]
    %v83 = vld [vmem:[#allocation2 + $0x168] sm:$0xff]
    %v84 = vld [vmem:[#allocation2 + $0x170] sm:$0xff]
    %v85 = vld [vmem:[#allocation2 + $0x178] sm:$0xff]
    %v86 = vld [vmem:[#allocation2 + $0x180] sm:$0xff]
    %v87 = vld [vmem:[#allocation2 + $0x188] sm:$0xff]
    %v88 = vld [vmem:[#allocation2 + $0x190] sm:$0xff]
    %v89 = vld [vmem:[#allocation2 + $0x198] sm:$0xff]
    %v90 = vld [vmem:[#allocation2 + $0x1a0] sm:$0xff]
    %v91 = vld [vmem:[#allocation2 + $0x1a8] sm:$0xff]
    %v92 = vld [vmem:[#allocation2 + $0x1b0] sm:$0xff]
    %v93 = vld [vmem:[#allocation2 + $0x1b8] sm:$0xff]
    %v94 = vld [vmem:[#allocation2 + $0x1c0] sm:$0xff]
    %v95 = vld [vmem:[#allocation2 + $0x1c8] sm:$0xff]
    %v96 = vld [vmem:[#allocation2 + $0x1d0] sm:$0xff]
    %v97 = vld [vmem:[#allocation2 + $0x1d8] sm:$0xff]
    %v98 = vld [vmem:[#allocation2 + $0x1e0] sm:$0xff]
    %v99 = vld [vmem:[#allocation2 + $0x1e8] sm:$0xff]
    %v100 = vld [vmem:[#allocation2 + $0x1f0] sm:$0xff]
    %v101 = vld [vmem:[#allocation2 + $0x1f8] sm:$0xff]
    %v102 = vld [vmem:[#allocation2 + $0x200] sm:$0xff]
    %v103 = vld [vmem:[#allocation2 + $0x208] sm:$0xff]
    %v104 = vld [vmem:[#allocation2 + $0x210] sm:$0xff]
    %v105 = vld [vmem:[#allocation2 + $0x218] sm:$0xff]
    %v106 = vld [vmem:[#allocation2 + $0x220] sm:$0xff]
    %v107 = vld [vmem:[#allocation2 + $0x228] sm:$0xff]
    %v108 = vld [vmem:[#allocation2 + $0x230] sm:$0xff]
    %v109 = vld [vmem:[#allocation2 + $0x238] sm:$0xff]
    %v110 = vld [vmem:[#allocation2 + $0x240] sm:$0xff]
    %v111 = vld [vmem:[#allocation2 + $0x248] sm:$0xff]
    %v112 = vld [vmem:[#allocation2 + $0x250] sm:$0xff]
    %v113 = vld [vmem:[#allocation2 + $0x258] sm:$0xff]
    %v114 = vld [vmem:[#allocation2 + $0x260] sm:$0xff]
    %v115 = vld [vmem:[#allocation2 + $0x268] sm:$0xff]
    %v116 = vld [vmem:[#allocation2 + $0x270] sm:$0xff]
    %v117 = vld [vmem:[#allocation2 + $0x278] sm:$0xff]
    %v118 = vld [vmem:[#allocation2 + $0x280] sm:$0xff]
    %v119 = vld [vmem:[#allocation2 + $0x288] sm:$0xff]
    %v120 = vld [vmem:[#allocation2 + $0x290] sm:$0xff]
    %v121 = vld [vmem:[#allocation2 + $0x298] sm:$0xff]
    %v122 = vld [vmem:[#allocation2 + $0x2a0] sm:$0xff]
    %v123 = vld [vmem:[#allocation2 + $0x2a8] sm:$0xff]
    %v124 = vld [vmem:[#allocation2 + $0x2b0] sm:$0xff]
    %v125 = vld [vmem:[#allocation2 + $0x2b8] sm:$0xff]
    %v126 = vld [vmem:[#allocation2 + $0x2c0] sm:$0xff]
    %v127 = vld [vmem:[#allocation2 + $0x2c8] sm:$0xff]
    %v128 = vld [vmem:[#allocation2 + $0x2d0] sm:$0xff]
    %v129 = vld [vmem:[#allocation2 + $0x2d8] sm:$0xff]
    %v130 = vld [vmem:[#allocation2 + $0x2e0] sm:$0xff]
    %v131 = vld [vmem:[#allocation2 + $0x2e8] sm:$0xff]
    %v132 = vld [vmem:[#allocation2 + $0x2f0] sm:$0xff]
    %v133 = vld [vmem:[#allocation2 + $0x2f8] sm:$0xff]
    %v134 = vld [vmem:[#allocation2 + $0x300] sm:$0xff]
    %v135 = vld [vmem:[#allocation2 + $0x308] sm:$0xff]
    %v136 = vld [vmem:[#allocation2 + $0x310] sm:$0xff]
    %v137 = vld [vmem:[#allocation2 + $0x318] sm:$0xff]
    %v138 = vld [vmem:[#allocation2 + $0x320] sm:$0xff]
    %v139 = vld [vmem:[#allocation2 + $0x328] sm:$0xff]
    %v140 = vld [vmem:[#allocation2 + $0x330] sm:$0xff]
    %v141 = vld [vmem:[#allocation2 + $0x338] sm:$0xff]
    %v142 = vld [vmem:[#allocation2 + $0x340] sm:$0xff]
    %v143 = vld [vmem:[#allocation2 + $0x348] sm:$0xff]
    %v144 = vld [vmem:[#allocation2 + $0x350] sm:$0xff]
    %v145 = vld [vmem:[#allocation2 + $0x358] sm:$0xff]
    %v146 = vld [vmem:[#allocation2 + $0x360] sm:$0xff]
    %v147 = vld [vmem:[#allocation2 + $0x368] sm:$0xff]
    %v148 = vld [vmem:[#allocation2 + $0x370] sm:$0xff]
    %v149 = vld [vmem:[#allocation2 + $0x378] sm:$0xff]
    %v150 = vld [vmem:[#allocation2 + $0x380] sm:$0xff]
    %v151 = vld [vmem:[#allocation2 + $0x388] sm:$0xff]
    %v152 = vld [vmem:[#allocation2 + $0x390] sm:$0xff]
    %v153 = vld [vmem:[#allocation2 + $0x398] sm:$0xff]
    %v154 = vld [vmem:[#allocation2 + $0x3a0] sm:$0xff]
    %v155 = vld [vmem:[#allocation2 + $0x3a8] sm:$0xff]
    %v156 = vld [vmem:[#allocation2 + $0x3b0] sm:$0xff]
    %v157 = vld [vmem:[#allocation2 + $0x3b8] sm:$0xff]
    %v158 = vld [vmem:[#allocation2 + $0x3c0] sm:$0xff]
    %v159 = vld [vmem:[#allocation2 + $0x3c8] sm:$0xff]
    %v160 = vld [vmem:[#allocation2 + $0x3d0] sm:$0xff]
    %v161 = vld [vmem:[#allocation2 + $0x3d8] sm:$0xff]
    %v162 = vld [vmem:[#allocation2 + $0x3e0] sm:$0xff]
    %v163 = vld [vmem:[#allocation2 + $0x3e8] sm:$0xff]
    %v164 = vld [vmem:[#allocation2 + $0x3f0] sm:$0xff]
    %v165 = vld [vmem:[#allocation2 + $0x3f8] sm:$0xff]
    %v166 = vld [vmem:[%s3] sm:$0x1]
    %v167 = vld [vmem:[%s0] sm:$0xff]
    %v168 = vld [vmem:[%s0 + $0x8] sm:$0xff]
    %v169 = vld [vmem:[%s0 + $0x10] sm:$0xff]
    %v170 = vld [vmem:[%s0 + $0x18] sm:$0xff]
    %v171 = vld [vmem:[%s0 + $0x20] sm:$0xff]
    %v172 = vld [vmem:[%s0 + $0x28] sm:$0xff]
    %v173 = vld [vmem:[%s0 + $0x30] sm:$0xff]
    %v174 = vld [vmem:[%s0 + $0x38] sm:$0xff]
    %v176 = vlaneseq
    %v177 = vshrl.u32 %v176, 7
    %v178 = vsub.s32 0, %v177
    %v179 = vrot.slane %v166, %v178
    %181 = vmatprep.subr.mxu0 0.0
    %182 = vmatpush1.msra.mxu0 %v38
    %183 = vmatprep.subr.mxu0 0.0
    %184 = vmatpush1.msra.mxu0 %v39
    %185 = vmatprep.subr.mxu0 0.0
    %186 = vmatpush1.msra.mxu0 %v40
    %187 = vmatprep.subr.mxu0 0.0
    %188 = vmatpush1.msra.mxu0 %v41
    %189 = vmatprep.subr.mxu0 0.0
    %190 = vmatpush1.msra.mxu0 %v42
    %191 = vmatprep.subr.mxu0 0.0
    %192 = vmatpush1.msra.mxu0 %v43
    %193 = vmatprep.subr.mxu0 0.0
    %194 = vmatpush1.msra.mxu0 %v44
    %195 = vmatprep.subr.mxu0 0.0
    %196 = vmatpush1.msra.mxu0 %v45
    %197 = vmatprep.subr.mxu0 0.0
    %198 = vmatpush1.msra.mxu0 %v46
    %199 = vmatprep.subr.mxu0 0.0
    %200 = vmatpush1.msra.mxu0 %v47
    %201 = vmatprep.subr.mxu0 0.0
    %202 = vmatpush1.msra.mxu0 %v48
    %203 = vmatprep.subr.mxu0 0.0
    %204 = vmatpush1.msra.mxu0 %v49
    %205 = vmatprep.subr.mxu0 0.0
    %206 = vmatpush1.msra.mxu0 %v50
    %207 = vmatprep.subr.mxu0 0.0
    %208 = vmatpush1.msra.mxu0 %v51
    %209 = vmatprep.subr.mxu0 0.0
    %210 = vmatpush1.msra.mxu0 %v52
    %211 = vmatprep.subr.mxu0 0.0
    %212 = vmatpush1.msra.mxu0 %v53
    %213 = vmatprep.subr.mxu0 0.0
    %214 = vmatpush1.msra.mxu0 %v54
    %215 = vmatprep.subr.mxu0 0.0
    %216 = vmatpush1.msra.mxu0 %v55
    %217 = vmatprep.subr.mxu0 0.0
    %218 = vmatpush1.msra.mxu0 %v56
    %219 = vmatprep.subr.mxu0 0.0
    %220 = vmatpush1.msra.mxu0 %v57
    %221 = vmatprep.subr.mxu0 0.0
    %222 = vmatpush1.msra.mxu0 %v58
    %223 = vmatprep.subr.mxu0 0.0
    %224 = vmatpush1.msra.mxu0 %v59
    %225 = vmatprep.subr.mxu0 0.0
    %226 = vmatpush1.msra.mxu0 %v60
    %227 = vmatprep.subr.mxu0 0.0
    %228 = vmatpush1.msra.mxu0 %v61
    %229 = vmatprep.subr.mxu0 0.0
    %230 = vmatpush1.msra.mxu0 %v62
    %231 = vmatprep.subr.mxu0 0.0
    %232 = vmatpush1.msra.mxu0 %v63
    %233 = vmatprep.subr.mxu0 0.0
    %234 = vmatpush1.msra.mxu0 %v64
    %235 = vmatprep.subr.mxu0 0.0
    %236 = vmatpush1.msra.mxu0 %v65
    %237 = vmatprep.subr.mxu0 0.0
    %238 = vmatpush1.msra.mxu0 %v66
    %239 = vmatprep.subr.mxu0 0.0
    %240 = vmatpush1.msra.mxu0 %v67
    %241 = vmatprep.subr.mxu0 0.0
    %242 = vmatpush1.msra.mxu0 %v68
    %243 = vmatprep.subr.mxu0 0.0
    %244 = vmatpush1.msra.mxu0 %v69
    %245 = vmatprep.mubr.f32.mxu0 %v168
    %246 = vmatmul.mubr.f32.gmra.mrb[0].mxu0 %v167
    %v247 = vpop.f32.mrb[0].mxu0
    %v248 = vadd.f32 %v179, %v247
    %v249 = vpop.f32.mrb[0].mxu0
    %250 = vdwg.mxu0
    %251 = vmatprep.subr.mxu0 0.0
    %252 = vmatpush1.msra.mxu0 %v70
    %253 = vmatprep.subr.mxu0 0.0
    %254 = vmatpush1.msra.mxu0 %v71
    %255 = vmatprep.subr.mxu0 0.0
    %256 = vmatpush1.msra.mxu0 %v72
    %257 = vmatprep.subr.mxu0 0.0
    %258 = vmatpush1.msra.mxu0 %v73
    %259 = vmatprep.subr.mxu0 0.0
    %260 = vmatpush1.msra.mxu0 %v74
    %261 = vmatprep.subr.mxu0 0.0
    %262 = vmatpush1.msra.mxu0 %v75
    %263 = vmatprep.subr.mxu0 0.0
    %264 = vmatpush1.msra.mxu0 %v76
    %265 = vmatprep.subr.mxu0 0.0
    %266 = vmatpush1.msra.mxu0 %v77
    %267 = vmatprep.subr.mxu0 0.0
    %268 = vmatpush1.msra.mxu0 %v78
    %269 = vmatprep.subr.mxu0 0.0
    %270 = vmatpush1.msra.mxu0 %v79
    %271 = vmatprep.subr.mxu0 0.0
    %272 = vmatpush1.msra.mxu0 %v80
    %273 = vmatprep.subr.mxu0 0.0
    %274 = vmatpush1.msra.mxu0 %v81
    %275 = vmatprep.subr.mxu0 0.0
    %276 = vmatpush1.msra.mxu0 %v82
    %277 = vmatprep.subr.mxu0 0.0
    %278 = vmatpush1.msra.mxu0 %v83
    %279 = vmatprep.subr.mxu0 0.0
    %280 = vmatpush1.msra.mxu0 %v84
    %281 = vmatprep.subr.mxu0 0.0
    %282 = vmatpush1.msra.mxu0 %v85
    %283 = vmatprep.subr.mxu0 0.0
    %284 = vmatpush1.msra.mxu0 %v86
    %285 = vmatprep.subr.mxu0 0.0
    %286 = vmatpush1.msra.mxu0 %v87
    %287 = vmatprep.subr.mxu0 0.0
    %288 = vmatpush1.msra.mxu0 %v88
    %289 = vmatprep.subr.mxu0 0.0
    %290 = vmatpush1.msra.mxu0 %v89
    %291 = vmatprep.subr.mxu0 0.0
    %292 = vmatpush1.msra.mxu0 %v90
    %293 = vmatprep.subr.mxu0 0.0
    %294 = vmatpush1.msra.mxu0 %v91
    %295 = vmatprep.subr.mxu0 0.0
    %296 = vmatpush1.msra.mxu0 %v92
    %297 = vmatprep.subr.mxu0 0.0
    %298 = vmatpush1.msra.mxu0 %v93
    %299 = vmatprep.subr.mxu0 0.0
    %300 = vmatpush1.msra.mxu0 %v94
    %301 = vmatprep.subr.mxu0 0.0
    %302 = vmatpush1.msra.mxu0 %v95
    %303 = vmatprep.subr.mxu0 0.0
    %304 = vmatpush1.msra.mxu0 %v96
    %305 = vmatprep.subr.mxu0 0.0
    %306 = vmatpush1.msra.mxu0 %v97
    %307 = vmatprep.subr.mxu0 0.0
    %308 = vmatpush1.msra.mxu0 %v98
    %309 = vmatprep.subr.mxu0 0.0
    %310 = vmatpush1.msra.mxu0 %v99
    %311 = vmatprep.subr.mxu0 0.0
    %312 = vmatpush1.msra.mxu0 %v100
    %313 = vmatprep.subr.mxu0 0.0
    %314 = vmatpush1.msra.mxu0 %v101
    %315 = vmatprep.mubr.f32.mxu0 %v170
    %316 = vmatmul.mubr.f32.gmra.mrb[0].mxu0 %v169
    %v317 = vpop.f32.mrb[0].mxu0
    %v318 = vadd.f32 %v248, %v317
    %v319 = vpop.f32.mrb[0].mxu0
    %320 = vdwg.mxu0
    %321 = vmatprep.subr.mxu0 0.0
    %322 = vmatpush1.msra.mxu0 %v102
    %323 = vmatprep.subr.mxu0 0.0
    %324 = vmatpush1.msra.mxu0 %v103
    %325 = vmatprep.subr.mxu0 0.0
    %326 = vmatpush1.msra.mxu0 %v104
    %327 = vmatprep.subr.mxu0 0.0
    %328 = vmatpush1.msra.mxu0 %v105
    %329 = vmatprep.subr.mxu0 0.0
    %330 = vmatpush1.msra.mxu0 %v106
    %331 = vmatprep.subr.mxu0 0.0
    %332 = vmatpush1.msra.mxu0 %v107
    %333 = vmatprep.subr.mxu0 0.0
    %334 = vmatpush1.msra.mxu0 %v108
    %335 = vmatprep.subr.mxu0 0.0
    %336 = vmatpush1.msra.mxu0 %v109
    %337 = vmatprep.subr.mxu0 0.0
    %338 = vmatpush1.msra.mxu0 %v110
    %339 = vmatprep.subr.mxu0 0.0
    %340 = vmatpush1.msra.mxu0 %v111
    %341 = vmatprep.subr.mxu0 0.0
    %342 = vmatpush1.msra.mxu0 %v112
    %343 = vmatprep.subr.mxu0 0.0
    %344 = vmatpush1.msra.mxu0 %v113
    %345 = vmatprep.subr.mxu0 0.0
    %346 = vmatpush1.msra.mxu0 %v114
    %347 = vmatprep.subr.mxu0 0.0
    %348 = vmatpush1.msra.mxu0 %v115
    %349 = vmatprep.subr.mxu0 0.0
    %350 = vmatpush1.msra.mxu0 %v116
    %351 = vmatprep.subr.mxu0 0.0
    %352 = vmatpush1.msra.mxu0 %v117
    %353 = vmatprep.subr.mxu0 0.0
    %354 = vmatpush1.msra.mxu0 %v118
    %355 = vmatprep.subr.mxu0 0.0
    %356 = vmatpush1.msra.mxu0 %v119
    %357 = vmatprep.subr.mxu0 0.0
    %358 = vmatpush1.msra.mxu0 %v120
    %359 = vmatprep.subr.mxu0 0.0
    %360 = vmatpush1.msra.mxu0 %v121
    %361 = vmatprep.subr.mxu0 0.0
    %362 = vmatpush1.msra.mxu0 %v122
    %363 = vmatprep.subr.mxu0 0.0
    %364 = vmatpush1.msra.mxu0 %v123
    %365 = vmatprep.subr.mxu0 0.0
    %366 = vmatpush1.msra.mxu0 %v124
    %367 = vmatprep.subr.mxu0 0.0
    %368 = vmatpush1.msra.mxu0 %v125
    %369 = vmatprep.subr.mxu0 0.0
    %370 = vmatpush1.msra.mxu0 %v126
    %371 = vmatprep.subr.mxu0 0.0
    %372 = vmatpush1.msra.mxu0 %v127
    %373 = vmatprep.subr.mxu0 0.0
    %374 = vmatpush1.msra.mxu0 %v128
    %375 = vmatprep.subr.mxu0 0.0
    %376 = vmatpush1.msra.mxu0 %v129
    %377 = vmatprep.subr.mxu0 0.0
    %378 = vmatpush1.msra.mxu0 %v130
    %379 = vmatprep.subr.mxu0 0.0
    %380 = vmatpush1.msra.mxu0 %v131
    %381 = vmatprep.subr.mxu0 0.0
    %382 = vmatpush1.msra.mxu0 %v132
    %383 = vmatprep.subr.mxu0 0.0
    %384 = vmatpush1.msra.mxu0 %v133
    %385 = vmatprep.mubr.f32.mxu0 %v172
    %386 = vmatmul.mubr.f32.gmra.mrb[0].mxu0 %v171
    %v387 = vpop.f32.mrb[0].mxu0
    %v388 = vadd.f32 %v318, %v387
    %v389 = vpop.f32.mrb[0].mxu0
    %390 = vdwg.mxu0
    %391 = vmatprep.subr.mxu0 0.0
    %392 = vmatpush1.msra.mxu0 %v134
    %393 = vmatprep.subr.mxu0 0.0
    %394 = vmatpush1.msra.mxu0 %v135
    %395 = vmatprep.subr.mxu0 0.0
    %396 = vmatpush1.msra.mxu0 %v136
    %397 = vmatprep.subr.mxu0 0.0
    %398 = vmatpush1.msra.mxu0 %v137
    %399 = vmatprep.subr.mxu0 0.0
    %400 = vmatpush1.msra.mxu0 %v138
    %401 = vmatprep.subr.mxu0 0.0
    %402 = vmatpush1.msra.mxu0 %v139
    %403 = vmatprep.subr.mxu0 0.0
    %404 = vmatpush1.msra.mxu0 %v140
    %405 = vmatprep.subr.mxu0 0.0
    %406 = vmatpush1.msra.mxu0 %v141
    %407 = vmatprep.subr.mxu0 0.0
    %408 = vmatpush1.msra.mxu0 %v142
    %409 = vmatprep.subr.mxu0 0.0
    %410 = vmatpush1.msra.mxu0 %v143
    %411 = vmatprep.subr.mxu0 0.0
    %412 = vmatpush1.msra.mxu0 %v144
    %413 = vmatprep.subr.mxu0 0.0
    %414 = vmatpush1.msra.mxu0 %v145
    %415 = vmatprep.subr.mxu0 0.0
    %416 = vmatpush1.msra.mxu0 %v146
    %417 = vmatprep.subr.mxu0 0.0
    %418 = vmatpush1.msra.mxu0 %v147
    %419 = vmatprep.subr.mxu0 0.0
    %420 = vmatpush1.msra.mxu0 %v148
    %421 = vmatprep.subr.mxu0 0.0
    %422 = vmatpush1.msra.mxu0 %v149
    %423 = vmatprep.subr.mxu0 0.0
    %424 = vmatpush1.msra.mxu0 %v150
    %425 = vmatprep.subr.mxu0 0.0
    %426 = vmatpush1.msra.mxu0 %v151
    %427 = vmatprep.subr.mxu0 0.0
    %428 = vmatpush1.msra.mxu0 %v152
    %429 = vmatprep.subr.mxu0 0.0
    %430 = vmatpush1.msra.mxu0 %v153
    %431 = vmatprep.subr.mxu0 0.0
    %432 = vmatpush1.msra.mxu0 %v154
    %433 = vmatprep.subr.mxu0 0.0
    %434 = vmatpush1.msra.mxu0 %v155
    %435 = vmatprep.subr.mxu0 0.0
    %436 = vmatpush1.msra.mxu0 %v156
    %437 = vmatprep.subr.mxu0 0.0
    %438 = vmatpush1.msra.mxu0 %v157
    %439 = vmatprep.subr.mxu0 0.0
    %440 = vmatpush1.msra.mxu0 %v158
    %441 = vmatprep.subr.mxu0 0.0
    %442 = vmatpush1.msra.mxu0 %v159
    %443 = vmatprep.subr.mxu0 0.0
    %444 = vmatpush1.msra.mxu0 %v160
    %445 = vmatprep.subr.mxu0 0.0
    %446 = vmatpush1.msra.mxu0 %v161
    %447 = vmatprep.subr.mxu0 0.0
    %448 = vmatpush1.msra.mxu0 %v162
    %449 = vmatprep.subr.mxu0 0.0
    %450 = vmatpush1.msra.mxu0 %v163
    %451 = vmatprep.subr.mxu0 0.0
    %452 = vmatpush1.msra.mxu0 %v164
    %453 = vmatprep.subr.mxu0 0.0
    %454 = vmatpush1.msra.mxu0 %v165
    %455 = vmatprep.mubr.f32.mxu0 %v174
    %456 = vmatmul.mubr.f32.gmra.mrb[0].mxu0 %v173
    %v457 = vpop.f32.mrb[0].mxu0
    %v458 = vadd.f32 %v388, %v457
    %v459 = vpop.f32.mrb[0].mxu0
    %460 = vdwg.mxu0
    %v461 = vld [vmem:[%s1] sm:$0xff]
    %v462 = vld [vmem:[%s1 + $0x8] sm:$0xff]
    %v463 = vld [vmem:[%s1 + $0x10] sm:$0xff]
    %v464 = vld [vmem:[%s1 + $0x18] sm:$0xff]
    %v465 = vld [vmem:[%s1 + $0x20] sm:$0xff]
    %v466 = vld [vmem:[%s1 + $0x28] sm:$0xff]
    %v467 = vld [vmem:[%s1 + $0x30] sm:$0xff]
    %v468 = vld [vmem:[%s1 + $0x38] sm:$0xff]
    %469 = vmatprep.subr.mxu0 0.0
    %470 = vmatpush1.msra.mxu0 %v38
    %471 = vmatprep.subr.mxu0 0.0
    %472 = vmatpush1.msra.mxu0 %v39
    %473 = vmatprep.subr.mxu0 0.0
    %474 = vmatpush1.msra.mxu0 %v40
    %475 = vmatprep.subr.mxu0 0.0
    %476 = vmatpush1.msra.mxu0 %v41
    %477 = vmatprep.subr.mxu0 0.0
    %478 = vmatpush1.msra.mxu0 %v42
    %479 = vmatprep.subr.mxu0 0.0
    %480 = vmatpush1.msra.mxu0 %v43
    %481 = vmatprep.subr.mxu0 0.0
    %482 = vmatpush1.msra.mxu0 %v44
    %483 = vmatprep.subr.mxu0 0.0
    %484 = vmatpush1.msra.mxu0 %v45
    %485 = vmatprep.subr.mxu0 0.0
    %486 = vmatpush1.msra.mxu0 %v46
    %487 = vmatprep.subr.mxu0 0.0
    %488 = vmatpush1.msra.mxu0 %v47
    %489 = vmatprep.subr.mxu0 0.0
    %490 = vmatpush1.msra.mxu0 %v48
    %491 = vmatprep.subr.mxu0 0.0
    %492 = vmatpush1.msra.mxu0 %v49
    %493 = vmatprep.subr.mxu0 0.0
    %494 = vmatpush1.msra.mxu0 %v50
    %495 = vmatprep.subr.mxu0 0.0
    %496 = vmatpush1.msra.mxu0 %v51
    %497 = vmatprep.subr.mxu0 0.0
    %498 = vmatpush1.msra.mxu0 %v52
    %499 = vmatprep.subr.mxu0 0.0
    %500 = vmatpush1.msra.mxu0 %v53
    %501 = vmatprep.subr.mxu0 0.0
    %502 = vmatpush1.msra.mxu0 %v54
    %503 = vmatprep.subr.mxu0 0.0
    %504 = vmatpush1.msra.mxu0 %v55
    %505 = vmatprep.subr.mxu0 0.0
    %506 = vmatpush1.msra.mxu0 %v56
    %507 = vmatprep.subr.mxu0 0.0
    %508 = vmatpush1.msra.mxu0 %v57
    %509 = vmatprep.subr.mxu0 0.0
    %510 = vmatpush1.msra.mxu0 %v58
    %511 = vmatprep.subr.mxu0 0.0
    %512 = vmatpush1.msra.mxu0 %v59
    %513 = vmatprep.subr.mxu0 0.0
    %514 = vmatpush1.msra.mxu0 %v60
    %515 = vmatprep.subr.mxu0 0.0
    %516 = vmatpush1.msra.mxu0 %v61
    %517 = vmatprep.subr.mxu0 0.0
    %518 = vmatpush1.msra.mxu0 %v62
    %519 = vmatprep.subr.mxu0 0.0
    %520 = vmatpush1.msra.mxu0 %v63
    %521 = vmatprep.subr.mxu0 0.0
    %522 = vmatpush1.msra.mxu0 %v64
    %523 = vmatprep.subr.mxu0 0.0
    %524 = vmatpush1.msra.mxu0 %v65
    %525 = vmatprep.subr.mxu0 0.0
    %526 = vmatpush1.msra.mxu0 %v66
    %527 = vmatprep.subr.mxu0 0.0
    %528 = vmatpush1.msra.mxu0 %v67
    %529 = vmatprep.subr.mxu0 0.0
    %530 = vmatpush1.msra.mxu0 %v68
    %531 = vmatprep.subr.mxu0 0.0
    %532 = vmatpush1.msra.mxu0 %v69
    %533 = vmatprep.mubr.f32.mxu0 %v462
    %534 = vmatmul.mubr.f32.gmra.mrb[0].mxu0 %v461
    %v535 = vpop.f32.mrb[0].mxu0
    %v536 = vadd.f32 %v179, %v535
    %v537 = vpop.f32.mrb[0].mxu0
    %538 = vdwg.mxu0
    %539 = vmatprep.subr.mxu0 0.0
    %540 = vmatpush1.msra.mxu0 %v70
    %541 = vmatprep.subr.mxu0 0.0
    %542 = vmatpush1.msra.mxu0 %v71
    %543 = vmatprep.subr.mxu0 0.0
    %544 = vmatpush1.msra.mxu0 %v72
    %545 = vmatprep.subr.mxu0 0.0
    %546 = vmatpush1.msra.mxu0 %v73
    %547 = vmatprep.subr.mxu0 0.0
    %548 = vmatpush1.msra.mxu0 %v74
    %549 = vmatprep.subr.mxu0 0.0
    %550 = vmatpush1.msra.mxu0 %v75
    %551 = vmatprep.subr.mxu0 0.0
    %552 = vmatpush1.msra.mxu0 %v76
    %553 = vmatprep.subr.mxu0 0.0
    %554 = vmatpush1.msra.mxu0 %v77
    %555 = vmatprep.subr.mxu0 0.0
    %556 = vmatpush1.msra.mxu0 %v78
    %557 = vmatprep.subr.mxu0 0.0
    %558 = vmatpush1.msra.mxu0 %v79
    %559 = vmatprep.subr.mxu0 0.0
    %560 = vmatpush1.msra.mxu0 %v80
    %561 = vmatprep.subr.mxu0 0.0
    %562 = vmatpush1.msra.mxu0 %v81
    %563 = vmatprep.subr.mxu0 0.0
    %564 = vmatpush1.msra.mxu0 %v82
    %565 = vmatprep.subr.mxu0 0.0
    %566 = vmatpush1.msra.mxu0 %v83
    %567 = vmatprep.subr.mxu0 0.0
    %568 = vmatpush1.msra.mxu0 %v84
    %569 = vmatprep.subr.mxu0 0.0
    %570 = vmatpush1.msra.mxu0 %v85
    %571 = vmatprep.subr.mxu0 0.0
    %572 = vmatpush1.msra.mxu0 %v86
    %573 = vmatprep.subr.mxu0 0.0
    %574 = vmatpush1.msra.mxu0 %v87
    %575 = vmatprep.subr.mxu0 0.0
    %576 = vmatpush1.msra.mxu0 %v88
    %577 = vmatprep.subr.mxu0 0.0
    %578 = vmatpush1.msra.mxu0 %v89
    %579 = vmatprep.subr.mxu0 0.0
    %580 = vmatpush1.msra.mxu0 %v90
    %581 = vmatprep.subr.mxu0 0.0
    %582 = vmatpush1.msra.mxu0 %v91
    %583 = vmatprep.subr.mxu0 0.0
    %584 = vmatpush1.msra.mxu0 %v92
    %585 = vmatprep.subr.mxu0 0.0
    %586 = vmatpush1.msra.mxu0 %v93
    %587 = vmatprep.subr.mxu0 0.0
    %588 = vmatpush1.msra.mxu0 %v94
    %589 = vmatprep.subr.mxu0 0.0
    %590 = vmatpush1.msra.mxu0 %v95
    %591 = vmatprep.subr.mxu0 0.0
    %592 = vmatpush1.msra.mxu0 %v96
    %593 = vmatprep.subr.mxu0 0.0
    %594 = vmatpush1.msra.mxu0 %v97
    %595 = vmatprep.subr.mxu0 0.0
    %596 = vmatpush1.msra.mxu0 %v98
    %597 = vmatprep.subr.mxu0 0.0
    %598 = vmatpush1.msra.mxu0 %v99
    %599 = vmatprep.subr.mxu0 0.0
    %600 = vmatpush1.msra.mxu0 %v100
    %601 = vmatprep.subr.mxu0 0.0
    %602 = vmatpush1.msra.mxu0 %v101
    %603 = vmatprep.mubr.f32.mxu0 %v464
    %604 = vmatmul.mubr.f32.gmra.mrb[0].mxu0 %v463
    %v605 = vpop.f32.mrb[0].mxu0
    %v606 = vadd.f32 %v536, %v605
    %v607 = vpop.f32.mrb[0].mxu0
    %608 = vdwg.mxu0
    %609 = vmatprep.subr.mxu0 0.0
    %610 = vmatpush1.msra.mxu0 %v102
    %611 = vmatprep.subr.mxu0 0.0
    %612 = vmatpush1.msra.mxu0 %v103
    %613 = vmatprep.subr.mxu0 0.0
    %614 = vmatpush1.msra.mxu0 %v104
    %615 = vmatprep.subr.mxu0 0.0
    %616 = vmatpush1.msra.mxu0 %v105
    %617 = vmatprep.subr.mxu0 0.0
    %618 = vmatpush1.msra.mxu0 %v106
    %619 = vmatprep.subr.mxu0 0.0
    %620 = vmatpush1.msra.mxu0 %v107
    %621 = vmatprep.subr.mxu0 0.0
    %622 = vmatpush1.msra.mxu0 %v108
    %623 = vmatprep.subr.mxu0 0.0
    %624 = vmatpush1.msra.mxu0 %v109
    %625 = vmatprep.subr.mxu0 0.0
    %626 = vmatpush1.msra.mxu0 %v110
    %627 = vmatprep.subr.mxu0 0.0
    %628 = vmatpush1.msra.mxu0 %v111
    %629 = vmatprep.subr.mxu0 0.0
    %630 = vmatpush1.msra.mxu0 %v112
    %631 = vmatprep.subr.mxu0 0.0
    %632 = vmatpush1.msra.mxu0 %v113
    %633 = vmatprep.subr.mxu0 0.0
    %634 = vmatpush1.msra.mxu0 %v114
    %635 = vmatprep.subr.mxu0 0.0
    %636 = vmatpush1.msra.mxu0 %v115
    %637 = vmatprep.subr.mxu0 0.0
    %638 = vmatpush1.msra.mxu0 %v116
    %639 = vmatprep.subr.mxu0 0.0
    %640 = vmatpush1.msra.mxu0 %v117
    %641 = vmatprep.subr.mxu0 0.0
    %642 = vmatpush1.msra.mxu0 %v118
    %643 = vmatprep.subr.mxu0 0.0
    %644 = vmatpush1.msra.mxu0 %v119
    %645 = vmatprep.subr.mxu0 0.0
    %646 = vmatpush1.msra.mxu0 %v120
    %647 = vmatprep.subr.mxu0 0.0
    %648 = vmatpush1.msra.mxu0 %v121
    %649 = vmatprep.subr.mxu0 0.0
    %650 = vmatpush1.msra.mxu0 %v122
    %651 = vmatprep.subr.mxu0 0.0
    %652 = vmatpush1.msra.mxu0 %v123
    %653 = vmatprep.subr.mxu0 0.0
    %654 = vmatpush1.msra.mxu0 %v124
    %655 = vmatprep.subr.mxu0 0.0
    %656 = vmatpush1.msra.mxu0 %v125
    %657 = vmatprep.subr.mxu0 0.0
    %658 = vmatpush1.msra.mxu0 %v126
    %659 = vmatprep.subr.mxu0 0.0
    %660 = vmatpush1.msra.mxu0 %v127
    %661 = vmatprep.subr.mxu0 0.0
    %662 = vmatpush1.msra.mxu0 %v128
    %663 = vmatprep.subr.mxu0 0.0
    %664 = vmatpush1.msra.mxu0 %v129
    %665 = vmatprep.subr.mxu0 0.0
    %666 = vmatpush1.msra.mxu0 %v130
    %667 = vmatprep.subr.mxu0 0.0
    %668 = vmatpush1.msra.mxu0 %v131
    %669 = vmatprep.subr.mxu0 0.0
    %670 = vmatpush1.msra.mxu0 %v132
    %671 = vmatprep.subr.mxu0 0.0
    %672 = vmatpush1.msra.mxu0 %v133
    %673 = vmatprep.mubr.f32.mxu0 %v466
    %674 = vmatmul.mubr.f32.gmra.mrb[0].mxu0 %v465
    %v675 = vpop.f32.mrb[0].mxu0
    %v676 = vadd.f32 %v606, %v675
    %v677 = vpop.f32.mrb[0].mxu0
    %678 = vdwg.mxu0
    %679 = vmatprep.subr.mxu0 0.0
    %680 = vmatpush1.msra.mxu0 %v134
    %681 = vmatprep.subr.mxu0 0.0
    %682 = vmatpush1.msra.mxu0 %v135
    %683 = vmatprep.subr.mxu0 0.0
    %684 = vmatpush1.msra.mxu0 %v136
    %685 = vmatprep.subr.mxu0 0.0
    %686 = vmatpush1.msra.mxu0 %v137
    %687 = vmatprep.subr.mxu0 0.0
    %688 = vmatpush1.msra.mxu0 %v138
    %689 = vmatprep.subr.mxu0 0.0
    %690 = vmatpush1.msra.mxu0 %v139
    %691 = vmatprep.subr.mxu0 0.0
    %692 = vmatpush1.msra.mxu0 %v140
    %693 = vmatprep.subr.mxu0 0.0
    %694 = vmatpush1.msra.mxu0 %v141
    %695 = vmatprep.subr.mxu0 0.0
    %696 = vmatpush1.msra.mxu0 %v142
    %697 = vmatprep.subr.mxu0 0.0
    %698 = vmatpush1.msra.mxu0 %v143
    %699 = vmatprep.subr.mxu0 0.0
    %700 = vmatpush1.msra.mxu0 %v144
    %701 = vmatprep.subr.mxu0 0.0
    %702 = vmatpush1.msra.mxu0 %v145
    %703 = vmatprep.subr.mxu0 0.0
    %704 = vmatpush1.msra.mxu0 %v146
    %705 = vmatprep.subr.mxu0 0.0
    %706 = vmatpush1.msra.mxu0 %v147
    %707 = vmatprep.subr.mxu0 0.0
    %708 = vmatpush1.msra.mxu0 %v148
    %709 = vmatprep.subr.mxu0 0.0
    %710 = vmatpush1.msra.mxu0 %v149
    %711 = vmatprep.subr.mxu0 0.0
    %712 = vmatpush1.msra.mxu0 %v150
    %713 = vmatprep.subr.mxu0 0.0
    %714 = vmatpush1.msra.mxu0 %v151
    %715 = vmatprep.subr.mxu0 0.0
    %716 = vmatpush1.msra.mxu0 %v152
    %717 = vmatprep.subr.mxu0 0.0
    %718 = vmatpush1.msra.mxu0 %v153
    %719 = vmatprep.subr.mxu0 0.0
    %720 = vmatpush1.msra.mxu0 %v154
    %721 = vmatprep.subr.mxu0 0.0
    %722 = vmatpush1.msra.mxu0 %v155
    %723 = vmatprep.subr.mxu0 0.0
    %724 = vmatpush1.msra.mxu0 %v156
    %725 = vmatprep.subr.mxu0 0.0
    %726 = vmatpush1.msra.mxu0 %v157
    %727 = vmatprep.subr.mxu0 0.0
    %728 = vmatpush1.msra.mxu0 %v158
    %729 = vmatprep.subr.mxu0 0.0
    %730 = vmatpush1.msra.mxu0 %v159
    %731 = vmatprep.subr.mxu0 0.0
    %732 = vmatpush1.msra.mxu0 %v160
    %733 = vmatprep.subr.mxu0 0.0
    %734 = vmatpush1.msra.mxu0 %v161
    %735 = vmatprep.subr.mxu0 0.0
    %736 = vmatpush1.msra.mxu0 %v162
    %737 = vmatprep.subr.mxu0 0.0
    %738 = vmatpush1.msra.mxu0 %v163
    %739 = vmatprep.subr.mxu0 0.0
    %740 = vmatpush1.msra.mxu0 %v164
    %741 = vmatprep.subr.mxu0 0.0
    %742 = vmatpush1.msra.mxu0 %v165
    %743 = vmatprep.mubr.f32.mxu0 %v468
    %744 = vmatmul.mubr.f32.gmra.mrb[0].mxu0 %v467
    %v745 = vpop.f32.mrb[0].mxu0
    %v746 = vadd.f32 %v676, %v745
    %v747 = vpop.f32.mrb[0].mxu0
    %748 = vdwg.mxu0
    %v749 = vld [vmem:[%s4] sm:$0xff]
    %v750 = vld [vmem:[%s4 + $0x8] sm:$0xff]
    %v751 = vld [vmem:[%s4 + $0x10] sm:$0xff]
    %v752 = vld [vmem:[%s4 + $0x18] sm:$0xff]
    %v753 = vld [vmem:[%s4 + $0x20] sm:$0xff]
    %v754 = vld [vmem:[%s4 + $0x28] sm:$0xff]
    %v755 = vld [vmem:[%s4 + $0x30] sm:$0xff]
    %v756 = vld [vmem:[%s4 + $0x38] sm:$0xff]
    %v757 = vld [vmem:[%s4 + $0x40] sm:$0xff]
    %v758 = vld [vmem:[%s4 + $0x48] sm:$0xff]
    %v759 = vld [vmem:[%s4 + $0x50] sm:$0xff]
    %v760 = vld [vmem:[%s4 + $0x58] sm:$0xff]
    %v761 = vld [vmem:[%s4 + $0x60] sm:$0xff]
    %v762 = vld [vmem:[%s4 + $0x68] sm:$0xff]
    %v763 = vld [vmem:[%s4 + $0x70] sm:$0xff]
    %v764 = vld [vmem:[%s4 + $0x78] sm:$0xff]
    %vm765 = vcmask 64512
    %v767 = vsel %vm765, %v749, 0
    %v770 = vsel %vm765, %v750, 0
    %v773 = vsel %vm765, %v751, 0
    %v776 = vsel %vm765, %v752, 0
    %v779 = vsel %vm765, %v753, 0
    %v782 = vsel %vm765, %v754, 0
    %v785 = vsel %vm765, %v755, 0
    %v788 = vsel %vm765, %v756, 0
    %v791 = vsel %vm765, %v757, 0
    %v794 = vsel %vm765, %v758, 0
    %v797 = vsel %vm765, %v759, 0
    %v800 = vsel %vm765, %v760, 0
    %v803 = vsel %vm765, %v761, 0
    %v806 = vsel %vm765, %v762, 0
    %v809 = vsel %vm765, %v763, 0
    %v812 = vsel %vm765, %v764, 0
    %814 = vmatprep.subr.mxu0 0.0
    %815 = vmatpush1.msra.mxu0 %v458
    %816 = vmatprep.subr.mxu0 0.0
    %817 = vmatpush1.msra.mxu0 0.0
    %818 = vmatprep.subr.mxu0 0.0
    %819 = vmatpush1.msra.mxu0 0.0
    %820 = vmatprep.subr.mxu0 0.0
    %821 = vmatpush1.msra.mxu0 0.0
    %822 = vmatprep.subr.mxu0 0.0
    %823 = vmatpush1.msra.mxu0 0.0
    %824 = vmatprep.subr.mxu0 0.0
    %825 = vmatpush1.msra.mxu0 0.0
    %826 = vmatprep.subr.mxu0 0.0
    %827 = vmatpush1.msra.mxu0 0.0
    %828 = vmatprep.subr.mxu0 0.0
    %829 = vmatpush1.msra.mxu0 0.0
    %830 = vmatprep.subr.mxu0 0.0
    %831 = vmatpush1.msra.mxu0 0.0
    %832 = vmatprep.subr.mxu0 0.0
    %833 = vmatpush1.msra.mxu0 0.0
    %834 = vmatprep.subr.mxu0 0.0
    %835 = vmatpush1.msra.mxu0 0.0
    %836 = vmatprep.subr.mxu0 0.0
    %837 = vmatpush1.msra.mxu0 0.0
    %838 = vmatprep.subr.mxu0 0.0
    %839 = vmatpush1.msra.mxu0 0.0
    %840 = vmatprep.subr.mxu0 0.0
    %841 = vmatpush1.msra.mxu0 0.0
    %842 = vmatprep.subr.mxu0 0.0
    %843 = vmatpush1.msra.mxu0 0.0
    %844 = vmatprep.subr.mxu0 0.0
    %845 = vmatpush1.msra.mxu0 0.0
    %846 = vmatprep.subr.mxu0 0.0
    %847 = vmatpush1.msra.mxu0 0.0
    %848 = vmatprep.subr.mxu0 0.0
    %849 = vmatpush1.msra.mxu0 0.0
    %850 = vmatprep.subr.mxu0 0.0
    %851 = vmatpush1.msra.mxu0 0.0
    %852 = vmatprep.subr.mxu0 0.0
    %853 = vmatpush1.msra.mxu0 0.0
    %854 = vmatprep.subr.mxu0 0.0
    %855 = vmatpush1.msra.mxu0 0.0
    %856 = vmatprep.subr.mxu0 0.0
    %857 = vmatpush1.msra.mxu0 0.0
    %858 = vmatprep.subr.mxu0 0.0
    %859 = vmatpush1.msra.mxu0 0.0
    %860 = vmatprep.subr.mxu0 0.0
    %861 = vmatpush1.msra.mxu0 0.0
    %862 = vmatprep.subr.mxu0 0.0
    %863 = vmatpush1.msra.mxu0 0.0
    %864 = vmatprep.subr.mxu0 0.0
    %865 = vmatpush1.msra.mxu0 0.0
    %866 = vmatprep.subr.mxu0 0.0
    %867 = vmatpush1.msra.mxu0 0.0
    %868 = vmatprep.subr.mxu0 0.0
    %869 = vmatpush1.msra.mxu0 0.0
    %870 = vmatprep.subr.mxu0 0.0
    %871 = vmatpush1.msra.mxu0 0.0
    %872 = vmatprep.subr.mxu0 0.0
    %873 = vmatpush1.msra.mxu0 0.0
    %874 = vmatprep.subr.mxu0 0.0
    %875 = vmatpush1.msra.mxu0 0.0
    %876 = vmatprep.subr.mxu0 0.0
    %877 = vmatpush1.msra.mxu0 0.0
    %878 = vmatprep.mubr.f32.mxu0 0.0
    %879 = vmatmul.mubr.f32.gmra.mrb[0].mxu0 %v767
    %v880 = vpop.f32.mrb[0].mxu0
    %v881 = vadd.f32 0.0, %v880
    %v882 = vpop.f32.mrb[0].mxu0
    %883 = vmatprep.mubr.f32.mxu0 0.0
    %884 = vmatmul.mubr.f32.gmra.mrb[0].mxu0 %v770
    %v885 = vpop.f32.mrb[0].mxu0
    %v886 = vadd.f32 0.0, %v885
    %v887 = vpop.f32.mrb[0].mxu0
    %888 = vmatprep.mubr.f32.mxu0 0.0
    %889 = vmatmul.mubr.f32.gmra.mrb[0].mxu0 %v773
    %v890 = vpop.f32.mrb[0].mxu0
    %v891 = vadd.f32 0.0, %v890
    %v892 = vpop.f32.mrb[0].mxu0
    %893 = vmatprep.mubr.f32.mxu0 0.0
    %894 = vmatmul.mubr.f32.gmra.mrb[0].mxu0 %v776
    %v895 = vpop.f32.mrb[0].mxu0
    %v896 = vadd.f32 0.0, %v895
    %v897 = vpop.f32.mrb[0].mxu0
    %898 = vmatprep.mubr.f32.mxu0 0.0
    %899 = vmatmul.mubr.f32.gmra.mrb[0].mxu0 %v779
    %v900 = vpop.f32.mrb[0].mxu0
    %v901 = vadd.f32 0.0, %v900
    %v902 = vpop.f32.mrb[0].mxu0
    %903 = vmatprep.mubr.f32.mxu0 0.0
    %904 = vmatmul.mubr.f32.gmra.mrb[0].mxu0 %v782
    %v905 = vpop.f32.mrb[0].mxu0
    %v906 = vadd.f32 0.0, %v905
    %v907 = vpop.f32.mrb[0].mxu0
    %908 = vmatprep.mubr.f32.mxu0 0.0
    %909 = vmatmul.mubr.f32.gmra.mrb[0].mxu0 %v785
    %v910 = vpop.f32.mrb[0].mxu0
    %v911 = vadd.f32 0.0, %v910
    %v912 = vpop.f32.mrb[0].mxu0
    %913 = vmatprep.mubr.f32.mxu0 0.0
    %914 = vmatmul.mubr.f32.gmra.mrb[0].mxu0 %v788
    %v915 = vpop.f32.mrb[0].mxu0
    %v916 = vadd.f32 0.0, %v915
    %v917 = vpop.f32.mrb[0].mxu0
    %918 = vmatprep.mubr.f32.mxu0 0.0
    %919 = vmatmul.mubr.f32.gmra.mrb[0].mxu0 %v791
    %v920 = vpop.f32.mrb[0].mxu0
    %v921 = vadd.f32 0.0, %v920
    %v922 = vpop.f32.mrb[0].mxu0
    %923 = vmatprep.mubr.f32.mxu0 0.0
    %924 = vmatmul.mubr.f32.gmra.mrb[0].mxu0 %v794
    %v925 = vpop.f32.mrb[0].mxu0
    %v926 = vadd.f32 0.0, %v925
    %v927 = vpop.f32.mrb[0].mxu0
    %928 = vmatprep.mubr.f32.mxu0 0.0
    %929 = vmatmul.mubr.f32.gmra.mrb[0].mxu0 %v797
    %v930 = vpop.f32.mrb[0].mxu0
    %v931 = vadd.f32 0.0, %v930
    %v932 = vpop.f32.mrb[0].mxu0
    %933 = vmatprep.mubr.f32.mxu0 0.0
    %934 = vmatmul.mubr.f32.gmra.mrb[0].mxu0 %v800
    %v935 = vpop.f32.mrb[0].mxu0
    %v936 = vadd.f32 0.0, %v935
    %v937 = vpop.f32.mrb[0].mxu0
    %938 = vmatprep.mubr.f32.mxu0 0.0
    %939 = vmatmul.mubr.f32.gmra.mrb[0].mxu0 %v803
    %v940 = vpop.f32.mrb[0].mxu0
    %v941 = vadd.f32 0.0, %v940
    %v942 = vpop.f32.mrb[0].mxu0
    %943 = vmatprep.mubr.f32.mxu0 0.0
    %944 = vmatmul.mubr.f32.gmra.mrb[0].mxu0 %v806
    %v945 = vpop.f32.mrb[0].mxu0
    %v946 = vadd.f32 0.0, %v945
    %v947 = vpop.f32.mrb[0].mxu0
    %948 = vmatprep.mubr.f32.mxu0 0.0
    %949 = vmatmul.mubr.f32.gmra.mrb[0].mxu0 %v809
    %v950 = vpop.f32.mrb[0].mxu0
    %v951 = vadd.f32 0.0, %v950
    %v952 = vpop.f32.mrb[0].mxu0
    %953 = vmatprep.mubr.f32.mxu0 0.0
    %954 = vmatmul.mubr.f32.gmra.mrb[0].mxu0 %v812
    %v955 = vpop.f32.mrb[0].mxu0
    %v956 = vadd.f32 0.0, %v955
    %v957 = vpop.f32.mrb[0].mxu0
    %958 = vdwg.mxu0
    %v959 = vld [vmem:[%s5] sm:$0xff]
    %v960 = vld [vmem:[%s5 + $0x8] sm:$0xff]
    %v961 = vld [vmem:[%s5 + $0x10] sm:$0xff]
    %v962 = vld [vmem:[%s5 + $0x18] sm:$0xff]
    %v963 = vld [vmem:[%s5 + $0x20] sm:$0xff]
    %v964 = vld [vmem:[%s5 + $0x28] sm:$0xff]
    %v965 = vld [vmem:[%s5 + $0x30] sm:$0xff]
    %v966 = vld [vmem:[%s5 + $0x38] sm:$0xff]
    %v967 = vld [vmem:[%s5 + $0x40] sm:$0xff]
    %v968 = vld [vmem:[%s5 + $0x48] sm:$0xff]
    %v969 = vld [vmem:[%s5 + $0x50] sm:$0xff]
    %v970 = vld [vmem:[%s5 + $0x58] sm:$0xff]
    %v971 = vld [vmem:[%s5 + $0x60] sm:$0xff]
    %v972 = vld [vmem:[%s5 + $0x68] sm:$0xff]
    %v973 = vld [vmem:[%s5 + $0x70] sm:$0xff]
    %v974 = vld [vmem:[%s5 + $0x78] sm:$0xff]
    %976 = vset.pattern.permute.xlu0 0
    %977 = vperm.xlu0 %976, %v959
    %v978 = vpop.permute.xlu0 %977
    %981 = vset.pattern.permute.xlu0 0
    %982 = vperm.xlu0 %981, %v960
    %v983 = vpop.permute.xlu0 %982
    %986 = vset.pattern.permute.xlu0 0
    %987 = vperm.xlu0 %986, %v961
    %v988 = vpop.permute.xlu0 %987
    %991 = vset.pattern.permute.xlu0 0
    %992 = vperm.xlu0 %991, %v962
    %v993 = vpop.permute.xlu0 %992
    %996 = vset.pattern.permute.xlu0 0
    %997 = vperm.xlu0 %996, %v963
    %v998 = vpop.permute.xlu0 %997
    %1001 = vset.pattern.permute.xlu0 0
    %1002 = vperm.xlu0 %1001, %v964
    %v1003 = vpop.permute.xlu0 %1002
    %1006 = vset.pattern.permute.xlu0 0
    %1007 = vperm.xlu0 %1006, %v965
    %v1008 = vpop.permute.xlu0 %1007
    %1011 = vset.pattern.permute.xlu0 0
    %1012 = vperm.xlu0 %1011, %v966
    %v1013 = vpop.permute.xlu0 %1012
    %1016 = vset.pattern.permute.xlu0 0
    %1017 = vperm.xlu0 %1016, %v967
    %v1018 = vpop.permute.xlu0 %1017
    %1021 = vset.pattern.permute.xlu0 0
    %1022 = vperm.xlu0 %1021, %v968
    %v1023 = vpop.permute.xlu0 %1022
    %1026 = vset.pattern.permute.xlu0 0
    %1027 = vperm.xlu0 %1026, %v969
    %v1028 = vpop.permute.xlu0 %1027
    %1031 = vset.pattern.permute.xlu0 0
    %1032 = vperm.xlu0 %1031, %v970
    %v1033 = vpop.permute.xlu0 %1032
    %1036 = vset.pattern.permute.xlu0 0
    %1037 = vperm.xlu0 %1036, %v971
    %v1038 = vpop.permute.xlu0 %1037
    %1041 = vset.pattern.permute.xlu0 0
    %1042 = vperm.xlu0 %1041, %v972
    %v1043 = vpop.permute.xlu0 %1042
    %1046 = vset.pattern.permute.xlu0 0
    %1047 = vperm.xlu0 %1046, %v973
    %v1048 = vpop.permute.xlu0 %1047
    %1051 = vset.pattern.permute.xlu0 0
    %1052 = vperm.xlu0 %1051, %v974
    %v1053 = vpop.permute.xlu0 %1052
    %v1055 = vmul.f32 %v881, %v978
    %v1056 = vmul.f32 %v886, %v983
    %v1057 = vmul.f32 %v891, %v988
    %v1058 = vmul.f32 %v896, %v993
    %v1059 = vmul.f32 %v901, %v998
    %v1060 = vmul.f32 %v906, %v1003
    %v1061 = vmul.f32 %v911, %v1008
    %v1062 = vmul.f32 %v916, %v1013
    %v1063 = vmul.f32 %v921, %v1018
    %v1064 = vmul.f32 %v926, %v1023
    %v1065 = vmul.f32 %v931, %v1028
    %v1066 = vmul.f32 %v936, %v1033
    %v1067 = vmul.f32 %v941, %v1038
    %v1068 = vmul.f32 %v946, %v1043
    %v1069 = vmul.f32 %v951, %v1048
    %v1070 = vmul.f32 %v956, %v1053
    %1071 = vxpose.xlu0.b32.start [1/16] %v1055, 128
    %1072 = vxpose.xlu0.b32.cont [2/16] %v1056, 128
    %1073 = vxpose.xlu0.b32.cont [3/16] %v1057, 128
    %1074 = vxpose.xlu0.b32.cont [4/16] %v1058, 128
    %1075 = vxpose.xlu0.b32.cont [5/16] %v1059, 128
    %1076 = vxpose.xlu0.b32.cont [6/16] %v1060, 128
    %1077 = vxpose.xlu0.b32.cont [7/16] %v1061, 128
    %1078 = vxpose.xlu0.b32.cont [8/16] %v1062, 128
    %1079 = vxpose.xlu0.b32.cont [9/16] %v1063, 128
    %1080 = vxpose.xlu0.b32.cont [10/16] %v1064, 128
    %1081 = vxpose.xlu0.b32.cont [11/16] %v1065, 128
    %1082 = vxpose.xlu0.b32.cont [12/16] %v1066, 128
    %1083 = vxpose.xlu0.b32.cont [13/16] %v1067, 128
    %1084 = vxpose.xlu0.b32.cont [14/16] %v1068, 128
    %1085 = vxpose.xlu0.b32.cont [15/16] %v1069, 128
    %1086 = vxpose.xlu0.b32.end [16/16] %v1070, 128
    %v1087 = vpop.trf.xlu0
    %v1088 = vpop.trf.xlu0
    %v1089 = vpop.trf.xlu0
    %v1090 = vpop.trf.xlu0
    %v1091 = vpop.trf.xlu0
    %v1092 = vpop.trf.xlu0
    %v1093 = vpop.trf.xlu0
    %v1094 = vpop.trf.xlu0
    %v1095 = vpop.trf.xlu0
    %v1096 = vpop.trf.xlu0
    %v1097 = vpop.trf.xlu0
    %v1098 = vpop.trf.xlu0
    %v1099 = vpop.trf.xlu0
    %v1100 = vpop.trf.xlu0
    %v1101 = vpop.trf.xlu0
    %v1102 = vpop.trf.xlu0
    %v1103 = vmul.f32 %v746, %v746
    %1104 = vadd.xlane.f32.xlu0 %v1103
    %v1105 = vpop.xlane.xlu0 %1104
    %v1106 = vmul.f32 %v1087, %v1087
    %v1107 = vmul.f32 %v1088, %v1088
    %v1108 = vmul.f32 %v1089, %v1089
    %v1109 = vmul.f32 %v1090, %v1090
    %v1110 = vmul.f32 %v1091, %v1091
    %v1111 = vmul.f32 %v1092, %v1092
    %v1112 = vmul.f32 %v1093, %v1093
    %v1113 = vmul.f32 %v1094, %v1094
    %v1114 = vmul.f32 %v1095, %v1095
    %v1115 = vmul.f32 %v1096, %v1096
    %v1116 = vmul.f32 %v1097, %v1097
    %v1117 = vmul.f32 %v1098, %v1098
    %v1118 = vmul.f32 %v1099, %v1099
    %v1119 = vmul.f32 %v1100, %v1100
    %v1120 = vmul.f32 %v1101, %v1101
    %v1121 = vmul.f32 %v1102, %v1102
    %v1122 = vadd.f32 %v1106, %v1107
    %v1123 = vadd.f32 %v1122, %v1108
    %v1124 = vadd.f32 %v1123, %v1109
    %v1125 = vadd.f32 %v1124, %v1110
    %v1126 = vadd.f32 %v1125, %v1111
    %v1127 = vadd.f32 %v1126, %v1112
    %v1128 = vadd.f32 %v1127, %v1113
    %v1129 = vadd.f32 %v1128, %v1114
    %v1130 = vadd.f32 %v1129, %v1115
    %v1131 = vadd.f32 %v1130, %v1116
    %v1132 = vadd.f32 %v1131, %v1117
    %v1133 = vadd.f32 %v1132, %v1118
    %v1134 = vadd.f32 %v1133, %v1119
    %v1135 = vadd.f32 %v1134, %v1120
    %v1136 = vadd.f32 %v1135, %v1121
    %v1137 = vrot.slane %v1136, 4
    %v1138 = vadd.f32 %v1136, %v1137
    %v1139 = vrot.slane %v1138, 2
    %v1140 = vadd.f32 %v1138, %v1139
    %v1141 = vrot.slane %v1140, 1
    %v1142 = vadd.f32 %v1140, %v1141
    %1143 = vmatprep.subr.mxu0 0.0
    %1144 = vmatpush1.msra.mxu0 %v1087
    %1145 = vmatprep.subr.mxu0 0.0
    %1146 = vmatpush1.msra.mxu0 %v1088
    %1147 = vmatprep.subr.mxu0 0.0
    %1148 = vmatpush1.msra.mxu0 %v1089
    %1149 = vmatprep.subr.mxu0 0.0
    %1150 = vmatpush1.msra.mxu0 %v1090
    %1151 = vmatprep.subr.mxu0 0.0
    %1152 = vmatpush1.msra.mxu0 %v1091
    %1153 = vmatprep.subr.mxu0 0.0
    %1154 = vmatpush1.msra.mxu0 %v1092
    %1155 = vmatprep.subr.mxu0 0.0
    %1156 = vmatpush1.msra.mxu0 %v1093
    %1157 = vmatprep.subr.mxu0 0.0
    %1158 = vmatpush1.msra.mxu0 %v1094
    %1159 = vmatprep.subr.mxu0 0.0
    %1160 = vmatpush1.msra.mxu0 %v1095
    %1161 = vmatprep.subr.mxu0 0.0
    %1162 = vmatpush1.msra.mxu0 %v1096
    %1163 = vmatprep.subr.mxu0 0.0
    %1164 = vmatpush1.msra.mxu0 %v1097
    %1165 = vmatprep.subr.mxu0 0.0
    %1166 = vmatpush1.msra.mxu0 %v1098
    %1167 = vmatprep.subr.mxu0 0.0
    %1168 = vmatpush1.msra.mxu0 %v1099
    %1169 = vmatprep.subr.mxu0 0.0
    %1170 = vmatpush1.msra.mxu0 %v1100
    %1171 = vmatprep.subr.mxu0 0.0
    %1172 = vmatpush1.msra.mxu0 %v1101
    %1173 = vmatprep.subr.mxu0 0.0
    %1174 = vmatpush1.msra.mxu0 %v1102
    %1175 = vmatprep.subr.mxu0 0.0
    %1176 = vmatpush1.msra.mxu0 0.0
    %1177 = vmatprep.subr.mxu0 0.0
    %1178 = vmatpush1.msra.mxu0 0.0
    %1179 = vmatprep.subr.mxu0 0.0
    %1180 = vmatpush1.msra.mxu0 0.0
    %1181 = vmatprep.subr.mxu0 0.0
    %1182 = vmatpush1.msra.mxu0 0.0
    %1183 = vmatprep.subr.mxu0 0.0
    %1184 = vmatpush1.msra.mxu0 0.0
    %1185 = vmatprep.subr.mxu0 0.0
    %1186 = vmatpush1.msra.mxu0 0.0
    %1187 = vmatprep.subr.mxu0 0.0
    %1188 = vmatpush1.msra.mxu0 0.0
    %1189 = vmatprep.subr.mxu0 0.0
    %1190 = vmatpush1.msra.mxu0 0.0
    %1191 = vmatprep.subr.mxu0 0.0
    %1192 = vmatpush1.msra.mxu0 0.0
    %1193 = vmatprep.subr.mxu0 0.0
    %1194 = vmatpush1.msra.mxu0 0.0
    %1195 = vmatprep.subr.mxu0 0.0
    %1196 = vmatpush1.msra.mxu0 0.0
    %1197 = vmatprep.subr.mxu0 0.0
    %1198 = vmatpush1.msra.mxu0 0.0
    %1199 = vmatprep.subr.mxu0 0.0
    %1200 = vmatpush1.msra.mxu0 0.0
    %1201 = vmatprep.subr.mxu0 0.0
    %1202 = vmatpush1.msra.mxu0 0.0
    %1203 = vmatprep.subr.mxu0 0.0
    %1204 = vmatpush1.msra.mxu0 0.0
    %1205 = vmatprep.subr.mxu0 0.0
    %1206 = vmatpush1.msra.mxu0 0.0
    %1207 = vmatprep.mubr.f32.mxu0 0.0
    %1208 = vmatmul.mubr.f32.gmra.mrb[0].mxu0 %v746
    %v1209 = vpop.f32.mrb[0].mxu0
    %v1210 = vadd.f32 0.0, %v1209
    %v1211 = vpop.f32.mrb[0].mxu0
    %1212 = vdwg.mxu0
    %v1213 = vadd.f32 %v1105, %v1142
    %v1214 = vmul.f32 %v1210, 2.0
    %v1215 = vsub.f32 %v1213, %v1214
    %v1216 = vmax.f32 %v1215, 0.0
    %v1217 = vrsqrt.pop %v1216
    %v1218 = vmul.f32 %v1216, %v1217
    %vm1219 = vcmp.eq.f32.partialorder %v1216, inf
    %v1220 = vsel %vm1219, %v1216, %v1218
    %vm1221 = vcmp.eq.f32.partialorder %v1216, 0.0
    %v1222 = vand.u32 %v1216, 2147483648
    %v1223 = vsel %vm1221, %v1222, %v1220
    %v1224 = vsub.f32 0.0, %v1223
    %1225 = vst [vmem:[#allocation5] sm:$0xff] %v1224
    // Predicated region
    $region30: #{tpu_custom_call.1} parent=1 // pred_check
      _
    $region31: #{tpu_custom_call.1} parent=1 // pred_check_branch
      %1227 = sbr.rel (0) target = $region33
    $region32: #{tpu_custom_call.1} parent=1 // pred_region
      %s1229 = ssub.s32 128, 128
      %1230 = vsyncadd [#allocation4], %s1229
      %s1232 = sshll.u32 [#allocation5], 4
      %s1233 = int_to_ptr.vmem [resolvable:$true] %s1232
      %1235 = dma.vmem_to_hbm [thread:$0]  %s1233, 128, %s6, [#allocation4]
    $region33: #{tpu_custom_call.1} parent=1 // pred_fallthru
      _
    // Predicated region
    $region34: #{tpu_custom_call.1} parent=1 // pred_check
      _
    $region35: #{tpu_custom_call.1} parent=1 // pred_check_branch
      %1237 = sbr.rel (0) target = $region37
    $region36: #{tpu_custom_call.1} parent=1 // pred_region
      %1238 = dma.done [#allocation4], 128
    $region37: #{tpu_custom_call.1} parent=1 // pred_fallthru
      _
    %1239 = vsyncpa [#allocation3], 1
    %1240 = vsyncpa [#allocation4], 1

</llo_original>
